<compile_context>
chip_gen: v6e
topology: v6e:2x2x1
jax: 0.10.0
libtpu: 0.0.40
codegen_flags: <defaults>
</compile_context>

<pallas_src>
import math

import jax
import jax.numpy as jnp
from jax.experimental import pallas as pl
from jax.experimental.pallas import tpu as pltpu


def attention_share_kernel(meta_ref, hidden_ref, wk_ref, wq_ref, wv_ref,
                           wo_ref, gamma_ref, beta_ref, att_ref, weight_ref):
    tb, dk = hidden_ref.shape
    tbs, dv = meta_ref.shape
    S = tbs // tb
    O = wk_ref.shape[1]
    scale = 1.0 / math.sqrt(O)

    meta2 = meta_ref[...]                                                    # (tb*S, Dv)

    # ---- K projection (MXU). No fused-KV weight, so no lane-offset slice. ----
    k2 = jnp.dot(meta2, wk_ref[...], preferred_element_type=jnp.float32)     # (tb*S, O)
    q = jnp.dot(hidden_ref[...], wq_ref[...],
                preferred_element_type=jnp.float32)                          # (tb, O)

    # logits[b, s] = <K[b,s,:], Q[b,:]> * scale ; lane-axis (O) reduction.
    # Only the small post-matmul result is reshaped (sublane split, last dim kept).
    k3 = k2.reshape(tb, S, O)
    logits = jnp.sum(k3 * q[:, None, :], axis=-1) * scale                    # (tb, S)

    # ---- softmax over the sequence axis (lanes) ------------------------------
    m = jnp.max(logits, axis=-1, keepdims=True)
    e = jnp.exp(logits - m)
    denom = jnp.sum(e, axis=-1, keepdims=True)                               # (tb, 1)
    inv = pl.reciprocal(denom, approx=True)      # EUP slot (essentially free)
    inv = inv * (2.0 - denom * inv)              # one Newton step -> f32 accuracy
    w = e * inv                                                              # (tb, S)

    # ---- V projection after softmax (K-phase intermediates are dead now) -----
    v2 = jnp.dot(meta2, wv_ref[...], preferred_element_type=jnp.float32)     # (tb*S, O)
    v3 = v2.reshape(tb, S, O)
    att = jnp.sum(w[:, :, None] * v3, axis=1)                                # (tb, O)

    # ---- output_layer: Linear(no bias) -> Tanh -> LayerNorm -> Dropout(id) ---
    out = jnp.tanh(jnp.dot(att, wo_ref[...], preferred_element_type=jnp.float32))
    mu = jnp.mean(out, axis=-1, keepdims=True)
    var = jnp.mean((out - mu) * (out - mu), axis=-1, keepdims=True)          # two-pass
    out = (out - mu) * jax.lax.rsqrt(var + 1e-5)
    out = out * gamma_ref[...] + beta_ref[...]

    att_ref[...] = out.astype(att_ref.dtype)                                 # (tb, O)
    weight_ref[...] = w.astype(weight_ref.dtype)                             # (tb, S)


def _pick_batch_tile(B, S, Dv, Dk, O, itemsize=4, vmem_budget_bytes=28 << 20):
    """Largest batch tile whose double-buffered blocks + live matmul
    intermediates fit the VMEM budget.  The budget is conservative enough for
    v7x's 64 MiB VMEM; on v5e/v6e the scoped limit is raised to cover it."""
    lane = 128
    pad = lambda n: -(-n // lane) * lane
    per_row = itemsize * (
        2 * S * pad(Dv)                              # meta block, double-buffered
        + 2 * S * pad(O)                             # K (or V) projection + product temp
        + 2 * (pad(Dk) + 3 * pad(O) + pad(S))        # hidden block, Q/att/out, outputs
    )
    rows = max(8, (vmem_budget_bytes // per_row) // 8 * 8)
    if B <= rows:
        if B >= 16:
            # Split into >=2 grid steps so "parallel" can use both v7x TensorCores.
            half = -(-B // 2)
            return max(8, min(rows, ((half + 7) // 8) * 8))
        return B
    return rows


def attention_share(meta_state, hidden_previous, wk, wq, wv, wo, gamma, beta,
                    *, batch_tile=None, ingest_dtype=None):
    B, S, Dv = meta_state.shape
    Dk = hidden_previous.shape[1]
    O = wk.shape[1]

    tb = _pick_batch_tile(B, S, Dv, Dk, O) if batch_tile is None else int(batch_tile)
    tb = max(1, min(tb, B))

    if ingest_dtype is not None:
        # Optional (v6e/v7x): halve the dominant HBM read; math stays in f32.
        meta_state = meta_state.astype(ingest_dtype)
        hidden_previous = hidden_previous.astype(ingest_dtype)
        wk, wq, wv, wo = (w.astype(ingest_dtype) for w in (wk, wq, wv, wo))

    num_blocks = pl.cdiv(B, tb)
    Bp = num_blocks * tb

    # Pre-flatten the big tensor in the wrapper: the kernel never reshapes it.
    meta2 = meta_state.reshape(B * S, Dv)
    hidden = hidden_previous
    if Bp != B:
        meta2 = jnp.pad(meta2, ((0, (Bp - B) * S), (0, 0)))
        hidden = jnp.pad(hidden, ((0, Bp - B), (0, 0)))

    gamma2 = jnp.asarray(gamma, jnp.float32).reshape(1, O)
    beta2 = jnp.asarray(beta, jnp.float32).reshape(1, O)

    out_shapes = (
        jax.ShapeDtypeStruct((Bp, O), jnp.float32),   # attention
        jax.ShapeDtypeStruct((Bp, S), jnp.float32),   # softmax weights
    )

    grid_spec = pltpu.PrefetchScalarGridSpec(
        num_scalar_prefetch=0,
        grid=(num_blocks,),
        in_specs=[
            pl.BlockSpec((tb * S, Dv), lambda b: (b, 0)),   # meta_state (flattened)
            pl.BlockSpec((tb, Dk), lambda b: (b, 0)),       # hidden_previous
            pl.BlockSpec((Dv, O), lambda b: (0, 0)),        # Wk
            pl.BlockSpec((Dk, O), lambda b: (0, 0)),        # Wq
            pl.BlockSpec((Dv, O), lambda b: (0, 0)),        # Wv
            pl.BlockSpec((O, O), lambda b: (0, 0)),         # Wo
            pl.BlockSpec((1, O), lambda b: (0, 0)),         # LN gamma
            pl.BlockSpec((1, O), lambda b: (0, 0)),         # LN beta
        ],
        out_specs=[
            pl.BlockSpec((tb, O), lambda b: (b, 0)),
            pl.BlockSpec((tb, S), lambda b: (b, 0)),
        ],
    )

    att, w = pl.pallas_call(
        attention_share_kernel,
        out_shape=out_shapes,
        grid_spec=grid_spec,
        compiler_params=pltpu.CompilerParams(
            dimension_semantics=("parallel",),
            vmem_limit_bytes=48 * 1024 * 1024,   # raise scoped limit (v5e default 16 MiB)
        ),
    )(meta2, hidden, wk, wq, wv, wo, gamma2, beta2)

    if Bp != B:
        att = att[:B]
        w = w[:B]

    # Torch returns weight with a trailing singleton dim: (B, S, 1).  Adding it
    # in the wrapper is free layout plumbing.
    return att, w[..., None]


def attention_share_ref(meta_state, hidden_previous, wk, wq, wv, wo, gamma, beta):
    """Pure-JAX reference mirroring the PyTorch forward (eval mode)."""
    O = wk.shape[1]
    K = meta_state @ wk                                  # (B,S,O)
    Q = (hidden_previous @ wq)[:, :, None]               # (B,O,1)
    V = jnp.swapaxes(meta_state @ wv, -1, -2)            # (B,O,S)
    logits = (K @ Q) / jnp.sqrt(jnp.float32(O))          # (B,S,1)
    weight = jax.nn.softmax(logits, axis=1)
    mid = (V @ weight)[:, :, 0]                          # (B,O)
    o = jnp.tanh(mid @ wo)
    mu = jnp.mean(o, axis=-1, keepdims=True)
    var = jnp.mean((o - mu) ** 2, axis=-1, keepdims=True)
    o = (o - mu) / jnp.sqrt(var + 1e-5) * gamma + beta
    return o, weight


if __name__ == "__main__":
    B, S = 2, 8
    Dv, Dk, O = 32, 32, 32   # input_value_size, input_key_size, output_size

    key = jax.random.PRNGKey(0)
    ks = jax.random.split(key, 6)

    meta_state = jax.random.normal(ks[0], (B, S, Dv), dtype=jnp.float32)
    hidden_previous = jax.random.normal(ks[1], (B, Dk), dtype=jnp.float32)

    def init_w(k, fan_in, fan_out):
        bound = 1.0 / math.sqrt(fan_in)
        return jax.random.uniform(k, (fan_in, fan_out), jnp.float32, -bound, bound)

    wk = init_w(ks[2], Dv, O)
    wq = init_w(ks[3], Dk, O)
    wv = init_w(ks[4], Dv, O)
    wo = init_w(ks[5], O, O)
    gamma = jnp.ones((1, O), jnp.float32)
    beta = jnp.zeros((1, O), jnp.float32)

    att, weight = attention_share(meta_state, hidden_previous,
                                  wk, wq, wv, wo, gamma, beta)
    jax.block_until_ready((att, weight))

    att_ref, weight_ref = attention_share_ref(meta_state, hidden_previous,
                                              wk, wq, wv, wo, gamma, beta)
    assert att.shape == (B, O) and weight.shape == (B, S, 1)
    assert jnp.allclose(att, att_ref, atol=1e-4, rtol=1e-4)
    assert jnp.allclose(weight, weight_ref, atol=1e-4, rtol=1e-4)

    print("KERNEL_OK")
</pallas_src>

<mosaic_0001>
module attributes {stable_mosaic.version = 11 : i64} {
  func.func @attention_share_kernel(%arg0: i32, %arg1: memref<16x32xf32, #tpu.memory_space<vmem>>, %arg2: memref<2x32xf32, #tpu.memory_space<vmem>>, %arg3: memref<32x32xf32, #tpu.memory_space<vmem>>, %arg4: memref<32x32xf32, #tpu.memory_space<vmem>>, %arg5: memref<32x32xf32, #tpu.memory_space<vmem>>, %arg6: memref<32x32xf32, #tpu.memory_space<vmem>>, %arg7: memref<1x32xf32, #tpu.memory_space<vmem>>, %arg8: memref<1x32xf32, #tpu.memory_space<vmem>>, %arg9: memref<2x32xf32, #tpu.memory_space<vmem>>, %arg10: memref<2x8xf32, #tpu.memory_space<vmem>>) attributes {dimension_semantics = [#tpu.dimension_semantics<parallel>], iteration_bounds = array<i64: 1>, scalar_prefetch = 0 : i64, scratch_operands = 0 : i64, tpu.core_type = #tpu.core_type<tc>, window_params = [{transform_indices = @transform_0, window_bounds = array<i64: 16, 32>}, {transform_indices = @transform_1, window_bounds = array<i64: 2, 32>}, {pipeline_mode = #tpu.pipeline_mode<synchronous>, transform_indices = @transform_2, window_bounds = array<i64: 32, 32>}, {pipeline_mode = #tpu.pipeline_mode<synchronous>, transform_indices = @transform_3, window_bounds = array<i64: 32, 32>}, {pipeline_mode = #tpu.pipeline_mode<synchronous>, transform_indices = @transform_4, window_bounds = array<i64: 32, 32>}, {pipeline_mode = #tpu.pipeline_mode<synchronous>, transform_indices = @transform_5, window_bounds = array<i64: 32, 32>}, {pipeline_mode = #tpu.pipeline_mode<synchronous>, transform_indices = @transform_6, window_bounds = array<i64: 1, 32>}, {pipeline_mode = #tpu.pipeline_mode<synchronous>, transform_indices = @transform_7, window_bounds = array<i64: 1, 32>}, {transform_indices = @transform_8, window_bounds = array<i64: 2, 32>}, {transform_indices = @transform_9, window_bounds = array<i64: 2, 8>}]} {
    %c0 = arith.constant 0 : index
    %c0_0 = arith.constant 0 : index
    %0 = vector.load %arg1[%c0, %c0_0] : memref<16x32xf32, #tpu.memory_space<vmem>>, vector<16x32xf32>
    %c0_1 = arith.constant 0 : index
    %c0_2 = arith.constant 0 : index
    %1 = vector.load %arg3[%c0_1, %c0_2] : memref<32x32xf32, #tpu.memory_space<vmem>>, vector<32x32xf32>
    %cst = arith.constant dense<0.000000e+00> : vector<16x32xf32>
    %2 = tpu.matmul %0, %1, %cst {dimension_numbers = #tpu.dot_dimension_numbers<[1], [0], [0], [1], [0, 0, 1, 1], [], []>} : vector<16x32xf32>, vector<32x32xf32>, vector<16x32xf32> -> vector<16x32xf32>
    %c0_3 = arith.constant 0 : index
    %c0_4 = arith.constant 0 : index
    %3 = vector.load %arg2[%c0_3, %c0_4] : memref<2x32xf32, #tpu.memory_space<vmem>>, vector<2x32xf32>
    %c0_5 = arith.constant 0 : index
    %c0_6 = arith.constant 0 : index
    %4 = vector.load %arg4[%c0_5, %c0_6] : memref<32x32xf32, #tpu.memory_space<vmem>>, vector<32x32xf32>
    %cst_7 = arith.constant dense<0.000000e+00> : vector<2x32xf32>
    %5 = tpu.matmul %3, %4, %cst_7 {dimension_numbers = #tpu.dot_dimension_numbers<[1], [0], [0], [1], [0, 0, 1, 1], [], []>} : vector<2x32xf32>, vector<32x32xf32>, vector<2x32xf32> -> vector<2x32xf32>
    %6 = vector.shape_cast %2 : vector<16x32xf32> to vector<2x8x32xf32>
    %7 = vector.shape_cast %5 : vector<2x32xf32> to vector<2x1x32xf32>
    %8 = vector.broadcast %7 : vector<2x1x32xf32> to vector<2x8x32xf32>
    %9 = arith.mulf %6, %8 : vector<2x8x32xf32>
    %cst_8 = arith.constant dense<0.000000e+00> : vector<2x8xf32>
    %10 = vector.multi_reduction <add>, %9, %cst_8 [2] : vector<2x8x32xf32> to vector<2x8xf32>
    %cst_9 = arith.constant 0.176776692 : f32
    %11 = vector.broadcast %cst_9 : f32 to vector<2x8xf32>
    %12 = arith.mulf %10, %11 : vector<2x8xf32>
    %cst_10 = arith.constant dense<0xFF800000> : vector<2xf32>
    %13 = vector.multi_reduction <maximumf>, %12, %cst_10 [1] : vector<2x8xf32> to vector<2xf32>
    %14 = vector.shape_cast %13 : vector<2xf32> to vector<2x1xf32>
    %15 = vector.broadcast %14 : vector<2x1xf32> to vector<2x8xf32>
    %16 = arith.subf %12, %15 : vector<2x8xf32>
    %17 = math.exp %16 : vector<2x8xf32>
    %cst_11 = arith.constant dense<0.000000e+00> : vector<2xf32>
    %18 = vector.multi_reduction <add>, %17, %cst_11 [1] : vector<2x8xf32> to vector<2xf32>
    %19 = vector.shape_cast %18 : vector<2xf32> to vector<2x1xf32>
    %20 = tpu.reciprocal %19 {approx = true} : vector<2x1xf32> -> vector<2x1xf32>
    %21 = arith.mulf %19, %20 : vector<2x1xf32>
    %cst_12 = arith.constant 2.000000e+00 : f32
    %22 = vector.broadcast %cst_12 : f32 to vector<2x1xf32>
    %23 = arith.subf %22, %21 : vector<2x1xf32>
    %24 = arith.mulf %20, %23 : vector<2x1xf32>
    %25 = vector.broadcast %24 : vector<2x1xf32> to vector<2x8xf32>
    %26 = arith.mulf %17, %25 : vector<2x8xf32>
    %c0_13 = arith.constant 0 : index
    %c0_14 = arith.constant 0 : index
    %27 = vector.load %arg5[%c0_13, %c0_14] : memref<32x32xf32, #tpu.memory_space<vmem>>, vector<32x32xf32>
    %cst_15 = arith.constant dense<0.000000e+00> : vector<16x32xf32>
    %28 = tpu.matmul %0, %27, %cst_15 {dimension_numbers = #tpu.dot_dimension_numbers<[1], [0], [0], [1], [0, 0, 1, 1], [], []>} : vector<16x32xf32>, vector<32x32xf32>, vector<16x32xf32> -> vector<16x32xf32>
    %29 = vector.shape_cast %28 : vector<16x32xf32> to vector<2x8x32xf32>
    %30 = vector.shape_cast %26 : vector<2x8xf32> to vector<2x8x1xf32>
    %31 = vector.broadcast %30 : vector<2x8x1xf32> to vector<2x8x32xf32>
    %32 = arith.mulf %31, %29 : vector<2x8x32xf32>
    %cst_16 = arith.constant dense<0.000000e+00> : vector<2x32xf32>
    %33 = vector.multi_reduction <add>, %32, %cst_16 [1] : vector<2x8x32xf32> to vector<2x32xf32>
    %c0_17 = arith.constant 0 : index
    %c0_18 = arith.constant 0 : index
    %34 = vector.load %arg6[%c0_17, %c0_18] : memref<32x32xf32, #tpu.memory_space<vmem>>, vector<32x32xf32>
    %cst_19 = arith.constant dense<0.000000e+00> : vector<2x32xf32>
    %35 = tpu.matmul %33, %34, %cst_19 {dimension_numbers = #tpu.dot_dimension_numbers<[1], [0], [0], [1], [0, 0, 1, 1], [], []>} : vector<2x32xf32>, vector<32x32xf32>, vector<2x32xf32> -> vector<2x32xf32>
    %36 = math.tanh %35 : vector<2x32xf32>
    %cst_20 = arith.constant dense<0.000000e+00> : vector<2xf32>
    %37 = vector.multi_reduction <add>, %36, %cst_20 [1] : vector<2x32xf32> to vector<2xf32>
    %38 = vector.shape_cast %37 : vector<2xf32> to vector<2x1xf32>
    %cst_21 = arith.constant 3.200000e+01 : f32
    %39 = vector.broadcast %cst_21 : f32 to vector<2x1xf32>
    %40 = arith.divf %38, %39 : vector<2x1xf32>
    %41 = vector.broadcast %40 : vector<2x1xf32> to vector<2x32xf32>
    %42 = arith.subf %36, %41 : vector<2x32xf32>
    %43 = vector.broadcast %40 : vector<2x1xf32> to vector<2x32xf32>
    %44 = arith.subf %36, %43 : vector<2x32xf32>
    %45 = arith.mulf %42, %44 : vector<2x32xf32>
    %cst_22 = arith.constant dense<0.000000e+00> : vector<2xf32>
    %46 = vector.multi_reduction <add>, %45, %cst_22 [1] : vector<2x32xf32> to vector<2xf32>
    %47 = vector.shape_cast %46 : vector<2xf32> to vector<2x1xf32>
    %cst_23 = arith.constant 3.200000e+01 : f32
    %48 = vector.broadcast %cst_23 : f32 to vector<2x1xf32>
    %49 = arith.divf %47, %48 : vector<2x1xf32>
    %50 = vector.broadcast %40 : vector<2x1xf32> to vector<2x32xf32>
    %51 = arith.subf %36, %50 : vector<2x32xf32>
    %cst_24 = arith.constant 9.99999974E-6 : f32
    %52 = vector.broadcast %cst_24 : f32 to vector<2x1xf32>
    %53 = arith.addf %49, %52 : vector<2x1xf32>
    %54 = math.rsqrt %53 : vector<2x1xf32>
    %55 = vector.broadcast %54 : vector<2x1xf32> to vector<2x32xf32>
    %56 = arith.mulf %51, %55 : vector<2x32xf32>
    %c0_25 = arith.constant 0 : index
    %c0_26 = arith.constant 0 : index
    %57 = vector.load %arg7[%c0_25, %c0_26] : memref<1x32xf32, #tpu.memory_space<vmem>>, vector<1x32xf32>
    %58 = vector.broadcast %57 : vector<1x32xf32> to vector<2x32xf32>
    %59 = arith.mulf %56, %58 : vector<2x32xf32>
    %c0_27 = arith.constant 0 : index
    %c0_28 = arith.constant 0 : index
    %60 = vector.load %arg8[%c0_27, %c0_28] : memref<1x32xf32, #tpu.memory_space<vmem>>, vector<1x32xf32>
    %61 = vector.broadcast %60 : vector<1x32xf32> to vector<2x32xf32>
    %62 = arith.addf %59, %61 : vector<2x32xf32>
    %c0_29 = arith.constant 0 : index
    %c0_30 = arith.constant 0 : index
    %63 = vector.load %arg9[%c0_29, %c0_30] : memref<2x32xf32, #tpu.memory_space<vmem>>, vector<2x32xf32>
    tpu.vector_store %arg9[%c0_29, %c0_30], %62 {strides = array<i32>} : memref<2x32xf32, #tpu.memory_space<vmem>>, vector<2x32xf32>,
    %c0_31 = arith.constant 0 : index
    %c0_32 = arith.constant 0 : index
    %64 = vector.load %arg10[%c0_31, %c0_32] : memref<2x8xf32, #tpu.memory_space<vmem>>, vector<2x8xf32>
    tpu.vector_store %arg10[%c0_31, %c0_32], %26 {strides = array<i32>} : memref<2x8xf32, #tpu.memory_space<vmem>>, vector<2x8xf32>,
    return
  }
  func.func @transform_0(%arg0: i32) -> (i32, i32) {
    %c0_i32 = arith.constant 0 : i32
    %c0_i32_0 = arith.constant 0 : i32
    return %arg0, %c0_i32 : i32, i32
  }
  func.func @transform_1(%arg0: i32) -> (i32, i32) {
    %c0_i32 = arith.constant 0 : i32
    %c0_i32_0 = arith.constant 0 : i32
    return %arg0, %c0_i32 : i32, i32
  }
  func.func @transform_2(%arg0: i32) -> (i32, i32) {
    %c0_i32 = arith.constant 0 : i32
    %c0_i32_0 = arith.constant 0 : i32
    %c0_i32_1 = arith.constant 0 : i32
    return %c0_i32, %c0_i32_0 : i32, i32
  }
  func.func @transform_3(%arg0: i32) -> (i32, i32) {
    %c0_i32 = arith.constant 0 : i32
    %c0_i32_0 = arith.constant 0 : i32
    %c0_i32_1 = arith.constant 0 : i32
    return %c0_i32, %c0_i32_0 : i32, i32
  }
  func.func @transform_4(%arg0: i32) -> (i32, i32) {
    %c0_i32 = arith.constant 0 : i32
    %c0_i32_0 = arith.constant 0 : i32
    %c0_i32_1 = arith.constant 0 : i32
    return %c0_i32, %c0_i32_0 : i32, i32
  }
  func.func @transform_5(%arg0: i32) -> (i32, i32) {
    %c0_i32 = arith.constant 0 : i32
    %c0_i32_0 = arith.constant 0 : i32
    %c0_i32_1 = arith.constant 0 : i32
    return %c0_i32, %c0_i32_0 : i32, i32
  }
  func.func @transform_6(%arg0: i32) -> (i32, i32) {
    %c0_i32 = arith.constant 0 : i32
    %c0_i32_0 = arith.constant 0 : i32
    %c0_i32_1 = arith.constant 0 : i32
    return %c0_i32, %c0_i32_0 : i32, i32
  }
  func.func @transform_7(%arg0: i32) -> (i32, i32) {
    %c0_i32 = arith.constant 0 : i32
    %c0_i32_0 = arith.constant 0 : i32
    %c0_i32_1 = arith.constant 0 : i32
    return %c0_i32, %c0_i32_0 : i32, i32
  }
  func.func @transform_8(%arg0: i32) -> (i32, i32) {
    %c0_i32 = arith.constant 0 : i32
    %c0_i32_0 = arith.constant 0 : i32
    return %arg0, %c0_i32 : i32, i32
  }
  func.func @transform_9(%arg0: i32) -> (i32, i32) {
    %c0_i32 = arith.constant 0 : i32
    %c0_i32_0 = arith.constant 0 : i32
    return %arg0, %c0_i32 : i32, i32
  }
}

</mosaic_0001>

<llo_original>
// kernel: tpu_custom_call.1
$region0: #{tpu_custom_call.1}
  #allocation0 [shape = 'u32[]', space=smem, size = 0x4, offset = 0x4, fixed_abs, tag = 'smem constant byte address 0x4 - core index']
  #allocation1 [shape = 'u32[144,128]{1,0:T(1,128)}', space=vmem, size = 0x12000, scoped, tag = 'internal scratch']
  %s0 = inlined_call_operand.hbm [shape: f32[16,32], index: 0, kind: input, shape index: {}]
  %s1 = inlined_call_operand.hbm [shape: f32[2,32], index: 1, kind: input, shape index: {}]
  %s2 = inlined_call_operand.hbm [shape: f32[32,32], index: 2, kind: input, shape index: {}]
  %s3 = inlined_call_operand.hbm [shape: f32[32,32], index: 3, kind: input, shape index: {}]
  %s4 = inlined_call_operand.hbm [shape: f32[32,32], index: 4, kind: input, shape index: {}]
  %s5 = inlined_call_operand.hbm [shape: f32[32,32], index: 5, kind: input, shape index: {}]
  %s6 = inlined_call_operand.vmem [shape: f32[1,32], index: 6, kind: input, shape index: {}]
  %s7 = inlined_call_operand.vmem [shape: f32[1,32], index: 7, kind: input, shape index: {}]
  %s8 = inlined_call_operand.hbm [shape: f32[2,32], index: 8, kind: output, shape index: {0}]
  %s9 = inlined_call_operand.hbm [shape: f32[2,8], index: 9, kind: output, shape index: {1}]
  %10 = xla_tuple %s8, %s9
  %s11 = sld [smem:[#allocation0]]
  $region74: #{tpu_custom_call.1} parent=0
    _
  %s13 = ssub.s32 1, %s11
  %s14 = scalar_select 0, %s13, %s11
  $region1: #{tpu_custom_call.1} parent=0
    #allocation2 [shape = 'u8[8192]{0}', space=vmem, size = 0x2000, scoped, tag = 'input window, operand 0, single buffered']
    #allocation3 [shape = 's32[1]{0}', space=sflag, size = 0x4, scoped, tag = 'scoped memory for tpu_custom_call.1']
    #allocation4 [shape = 's32[1]{0}', space=sflag, size = 0x4, scoped, tag = 'scoped memory for tpu_custom_call.1']
    #allocation5 [shape = 'u8[1024]{0}', space=vmem, size = 0x400, scoped, tag = 'input window, operand 1, single buffered']
    #allocation6 [shape = 's32[1]{0}', space=sflag, size = 0x4, scoped, tag = 'scoped memory for tpu_custom_call.1']
    #allocation7 [shape = 'u8[16384]{0}', space=vmem, size = 0x4000, scoped, tag = 'input window, operand 2, single buffered']
    #allocation8 [shape = 'u8[16384]{0}', space=vmem, size = 0x4000, scoped, tag = 'input window, operand 3, single buffered']
    #allocation9 [shape = 's32[1]{0}', space=sflag, size = 0x4, scoped, tag = 'scoped memory for tpu_custom_call.1']
    #allocation10 [shape = 'u8[16384]{0}', space=vmem, size = 0x4000, scoped, tag = 'input window, operand 4, single buffered']
    #allocation11 [shape = 'u8[16384]{0}', space=vmem, size = 0x4000, scoped, tag = 'input window, operand 5, single buffered']
    #allocation12 [shape = 's32[1]{0}', space=sflag, size = 0x4, scoped, tag = 'scoped memory for tpu_custom_call.1']
    #allocation13 [shape = 'u8[1024]{0}', space=vmem, size = 0x400, scoped, tag = 'output window, operand 0, single buffered']
    #allocation14 [shape = 'u8[1024]{0}', space=vmem, size = 0x400, scoped, tag = 'output window, operand 1, single buffered']
    #allocation15 [shape = 's32[1]{0}', space=sflag, size = 0x4, scoped, tag = 'scoped memory for tpu_custom_call.1']
    %15 = vsyncpa [#allocation3], 0
    %16 = vsyncpa [#allocation6], 0
    %17 = vsyncpa [#allocation9], 0
    %18 = vsyncpa [#allocation12], 0
    %19 = vsyncpa [#allocation4], 0
    %20 = vsyncpa [#allocation15], 0
    // Predicated region
    $region2: #{tpu_custom_call.1} parent=1 // pred_check
      _
    $region3: #{tpu_custom_call.1} parent=1 // pred_check_branch
      %22 = sbr.rel (0) target = $region5
    $region4: #{tpu_custom_call.1} parent=1 // pred_region
      %s24 = ssub.s32 256, 256
      %25 = vsyncadd [#allocation3], %s24
      %s26 = sshll.u32 [#allocation2], 4
      %s27 = int_to_ptr.vmem [resolvable:$true] %s26
      %32 = dma.hbm_to_vmem [thread:$0]  %s0, 256, %s27, [#allocation3], 128, 128, 8
    $region5: #{tpu_custom_call.1} parent=1 // pred_fallthru
      _
    // Predicated region
    $region6: #{tpu_custom_call.1} parent=1 // pred_check
      _
    $region7: #{tpu_custom_call.1} parent=1 // pred_check_branch
      %34 = sbr.rel (0) target = $region9
    $region8: #{tpu_custom_call.1} parent=1 // pred_region
      %s36 = ssub.s32 32, 32
      %37 = vsyncadd [#allocation6], %s36
      %s39 = sshll.u32 [#allocation5], 4
      %s40 = int_to_ptr.vmem [resolvable:$true] %s39
      %42 = dma.hbm_to_vmem [thread:$0]  %s1, 32, %s40, [#allocation6]
    $region9: #{tpu_custom_call.1} parent=1 // pred_fallthru
      _
    // Predicated region
    $region10: #{tpu_custom_call.1} parent=1 // pred_check
      _
    $region11: #{tpu_custom_call.1} parent=1 // pred_check_branch
      %44 = sbr.rel (0) target = $region13
    $region12: #{tpu_custom_call.1} parent=1 // pred_region
      %s46 = ssub.s32 512, 512
      %47 = vsyncadd [#allocation6], %s46
      %s48 = sshll.u32 [#allocation7], 4
      %s49 = int_to_ptr.vmem [resolvable:$true] %s48
      %54 = dma.hbm_to_vmem [thread:$0]  %s2, 512, %s49, [#allocation6], 128, 128, 8
    $region13: #{tpu_custom_call.1} parent=1 // pred_fallthru
      _
    // Predicated region
    $region14: #{tpu_custom_call.1} parent=1 // pred_check
      _
    $region15: #{tpu_custom_call.1} parent=1 // pred_check_branch
      %56 = sbr.rel (0) target = $region17
    $region16: #{tpu_custom_call.1} parent=1 // pred_region
      %s58 = ssub.s32 512, 512
      %59 = vsyncadd [#allocation9], %s58
      %s60 = sshll.u32 [#allocation8], 4
      %s61 = int_to_ptr.vmem [resolvable:$true] %s60
      %66 = dma.hbm_to_vmem [thread:$0]  %s3, 512, %s61, [#allocation9], 128, 128, 8
    $region17: #{tpu_custom_call.1} parent=1 // pred_fallthru
      _
    // Predicated region
    $region18: #{tpu_custom_call.1} parent=1 // pred_check
      _
    $region19: #{tpu_custom_call.1} parent=1 // pred_check_branch
      %68 = sbr.rel (0) target = $region21
    $region20: #{tpu_custom_call.1} parent=1 // pred_region
      %s70 = ssub.s32 512, 512
      %71 = vsyncadd [#allocation9], %s70
      %s72 = sshll.u32 [#allocation10], 4
      %s73 = int_to_ptr.vmem [resolvable:$true] %s72
      %78 = dma.hbm_to_vmem [thread:$0]  %s4, 512, %s73, [#allocation9], 128, 128, 8
    $region21: #{tpu_custom_call.1} parent=1 // pred_fallthru
      _
    // Predicated region
    $region22: #{tpu_custom_call.1} parent=1 // pred_check
      _
    $region23: #{tpu_custom_call.1} parent=1 // pred_check_branch
      %80 = sbr.rel (0) target = $region25
    $region24: #{tpu_custom_call.1} parent=1 // pred_region
      %s82 = ssub.s32 512, 512
      %83 = vsyncadd [#allocation12], %s82
      %s84 = sshll.u32 [#allocation11], 4
      %s85 = int_to_ptr.vmem [resolvable:$true] %s84
      %90 = dma.hbm_to_vmem [thread:$0]  %s5, 512, %s85, [#allocation12], 128, 128, 8
    $region25: #{tpu_custom_call.1} parent=1 // pred_fallthru
      _
    // Predicated region
    $region26: #{tpu_custom_call.1} parent=1 // pred_check
      _
    $region27: #{tpu_custom_call.1} parent=1 // pred_check_branch
      %92 = sbr.rel (0) target = $region29
    $region28: #{tpu_custom_call.1} parent=1 // pred_region
      _
    $region29: #{tpu_custom_call.1} parent=1 // pred_fallthru
      _
    // Predicated region
    $region30: #{tpu_custom_call.1} parent=1 // pred_check
      _
    $region31: #{tpu_custom_call.1} parent=1 // pred_check_branch
      %94 = sbr.rel (0) target = $region33
    $region32: #{tpu_custom_call.1} parent=1 // pred_region
      _
    $region33: #{tpu_custom_call.1} parent=1 // pred_fallthru
      _
    // Predicated region
    $region34: #{tpu_custom_call.1} parent=1 // pred_check
      _
    $region35: #{tpu_custom_call.1} parent=1 // pred_check_branch
      %96 = sbr.rel (0) target = $region37
    $region36: #{tpu_custom_call.1} parent=1 // pred_region
      %97 = dma.done [#allocation3], 256
    $region37: #{tpu_custom_call.1} parent=1 // pred_fallthru
      _
    // Predicated region
    $region38: #{tpu_custom_call.1} parent=1 // pred_check
      _
    $region39: #{tpu_custom_call.1} parent=1 // pred_check_branch
      %99 = sbr.rel (0) target = $region41
    $region40: #{tpu_custom_call.1} parent=1 // pred_region
      %100 = dma.done [#allocation6], 32
    $region41: #{tpu_custom_call.1} parent=1 // pred_fallthru
      _
    // Predicated region
    $region42: #{tpu_custom_call.1} parent=1 // pred_check
      _
    $region43: #{tpu_custom_call.1} parent=1 // pred_check_branch
      %102 = sbr.rel (0) target = $region45
    $region44: #{tpu_custom_call.1} parent=1 // pred_region
      %103 = dma.done [#allocation6], 512
    $region45: #{tpu_custom_call.1} parent=1 // pred_fallthru
      _
    // Predicated region
    $region46: #{tpu_custom_call.1} parent=1 // pred_check
      _
    $region47: #{tpu_custom_call.1} parent=1 // pred_check_branch
      %105 = sbr.rel (0) target = $region49
    $region48: #{tpu_custom_call.1} parent=1 // pred_region
      %106 = dma.done [#allocation9], 512
    $region49: #{tpu_custom_call.1} parent=1 // pred_fallthru
      _
    // Predicated region
    $region50: #{tpu_custom_call.1} parent=1 // pred_check
      _
    $region51: #{tpu_custom_call.1} parent=1 // pred_check_branch
      %108 = sbr.rel (0) target = $region53
    $region52: #{tpu_custom_call.1} parent=1 // pred_region
      %109 = dma.done [#allocation9], 512
    $region53: #{tpu_custom_call.1} parent=1 // pred_fallthru
      _
    // Predicated region
    $region54: #{tpu_custom_call.1} parent=1 // pred_check
      _
    $region55: #{tpu_custom_call.1} parent=1 // pred_check_branch
      %111 = sbr.rel (0) target = $region57
    $region56: #{tpu_custom_call.1} parent=1 // pred_region
      %112 = dma.done [#allocation12], 512
    $region57: #{tpu_custom_call.1} parent=1 // pred_fallthru
      _
    %v113 = vld [vmem:[#allocation2] sm:$0xff]
    %v114 = vld [vmem:[#allocation2 + $0x8] sm:$0xff]
    %v115 = vld [vmem:[#allocation7] sm:$0xff]
    %v116 = vld [vmem:[#allocation7 + $0x8] sm:$0xff]
    %v117 = vld [vmem:[#allocation7 + $0x10] sm:$0xff]
    %v118 = vld [vmem:[#allocation7 + $0x18] sm:$0xff]
    %vm119 = vcmask 261120
    %v121 = vsel %vm119, %v113, 0
    %v124 = vsel %vm119, %v114, 0
    %126 = vmatprep.subr.mxu0 0.0
    %127 = vmatpush1.msra.mxu0 0.0
    %128 = vmatprep.subr.mxu0 0.0
    %129 = vmatpush1.msra.mxu0 0.0
    %130 = vmatprep.subr.mxu0 0.0
    %131 = vmatpush1.msra.mxu0 0.0
    %132 = vmatprep.subr.mxu0 0.0
    %133 = vmatpush1.msra.mxu0 0.0
    %134 = vmatprep.subr.mxu0 0.0
    %135 = vmatpush1.msra.mxu0 0.0
    %136 = vmatprep.subr.mxu0 0.0
    %137 = vmatpush1.msra.mxu0 0.0
    %138 = vmatprep.subr.mxu0 0.0
    %139 = vmatpush1.msra.mxu0 0.0
    %140 = vmatprep.subr.mxu0 0.0
    %141 = vmatpush1.msra.mxu0 0.0
    %142 = vmatprep.subr.mxu0 0.0
    %143 = vmatpush1.msra.mxu0 0.0
    %144 = vmatprep.subr.mxu0 0.0
    %145 = vmatpush1.msra.mxu0 0.0
    %146 = vmatprep.subr.mxu0 0.0
    %147 = vmatpush1.msra.mxu0 0.0
    %148 = vmatprep.subr.mxu0 0.0
    %149 = vmatpush1.msra.mxu0 0.0
    %150 = vmatprep.subr.mxu0 0.0
    %151 = vmatpush1.msra.mxu0 %v118
    %152 = vmatprep.subr.mxu0 0.0
    %153 = vmatpush1.msra.mxu0 %v117
    %154 = vmatprep.subr.mxu0 0.0
    %155 = vmatpush1.msra.mxu0 %v116
    %156 = vmatprep.subr.mxu0 0.0
    %157 = vmatpush1.msra.mxu0 %v115
    %158 = vmatprep.subr.mxu0 0.0
    %159 = vmatpush2.msra.mxu0 0.0
    %160 = vmatprep.subr.mxu0 0.0
    %161 = vmatpush2.msra.mxu0 0.0
    %162 = vmatprep.subr.mxu0 0.0
    %163 = vmatpush2.msra.mxu0 0.0
    %164 = vmatprep.subr.mxu0 0.0
    %165 = vmatpush2.msra.mxu0 0.0
    %166 = vmatprep.subr.mxu0 0.0
    %167 = vmatpush2.msra.mxu0 0.0
    %168 = vmatprep.subr.mxu0 0.0
    %169 = vmatpush2.msra.mxu0 0.0
    %170 = vmatprep.subr.mxu0 0.0
    %171 = vmatpush2.msra.mxu0 0.0
    %172 = vmatprep.subr.mxu0 0.0
    %173 = vmatpush2.msra.mxu0 0.0
    %174 = vmatprep.subr.mxu0 0.0
    %175 = vmatpush2.msra.mxu0 0.0
    %176 = vmatprep.subr.mxu0 0.0
    %177 = vmatpush2.msra.mxu0 0.0
    %178 = vmatprep.subr.mxu0 0.0
    %179 = vmatpush2.msra.mxu0 0.0
    %180 = vmatprep.subr.mxu0 0.0
    %181 = vmatpush2.msra.mxu0 0.0
    %182 = vmatprep.subr.mxu0 0.0
    %183 = vmatpush2.msra.mxu0 0.0
    %184 = vmatprep.subr.mxu0 0.0
    %185 = vmatpush2.msra.mxu0 0.0
    %186 = vmatprep.subr.mxu0 0.0
    %187 = vmatpush2.msra.mxu0 0.0
    %188 = vmatprep.subr.mxu0 0.0
    %189 = vmatpush2.msra.mxu0 0.0
    %190 = vmatprep.mubr.f32.mxu0 0.0
    %191 = vmatmul.mubr.f32.gmra.mxu0 %v121
    %v192 = vpop.f32.mrf.mxu0
    %v193 = vadd.f32 0.0, %v192
    %v194 = vpop.f32.mrf.mxu0
    %195 = vmatprep.mubr.f32.mxu0 0.0
    %196 = vmatmul.mubr.f32.gmra.mxu0 %v124
    %v197 = vpop.f32.mrf.mxu0
    %v198 = vadd.f32 0.0, %v197
    %v199 = vpop.f32.mrf.mxu0
    %200 = vdwg.mxu0
    %v201 = vld [vmem:[#allocation5] sm:$0x3]
    %v202 = vld [vmem:[#allocation8] sm:$0xff]
    %v203 = vld [vmem:[#allocation8 + $0x8] sm:$0xff]
    %v204 = vld [vmem:[#allocation8 + $0x10] sm:$0xff]
    %v205 = vld [vmem:[#allocation8 + $0x18] sm:$0xff]
    %v207 = vsel %vm119, %v201, 0
    %209 = vmatprep.subr.mxu0 0.0
    %210 = vmatpush1.msra.mxu0 0.0
    %211 = vmatprep.subr.mxu0 0.0
    %212 = vmatpush1.msra.mxu0 0.0
    %213 = vmatprep.subr.mxu0 0.0
    %214 = vmatpush1.msra.mxu0 0.0
    %215 = vmatprep.subr.mxu0 0.0
    %216 = vmatpush1.msra.mxu0 0.0
    %217 = vmatprep.subr.mxu0 0.0
    %218 = vmatpush1.msra.mxu0 0.0
    %219 = vmatprep.subr.mxu0 0.0
    %220 = vmatpush1.msra.mxu0 0.0
    %221 = vmatprep.subr.mxu0 0.0
    %222 = vmatpush1.msra.mxu0 0.0
    %223 = vmatprep.subr.mxu0 0.0
    %224 = vmatpush1.msra.mxu0 0.0
    %225 = vmatprep.subr.mxu0 0.0
    %226 = vmatpush1.msra.mxu0 0.0
    %227 = vmatprep.subr.mxu0 0.0
    %228 = vmatpush1.msra.mxu0 0.0
    %229 = vmatprep.subr.mxu0 0.0
    %230 = vmatpush1.msra.mxu0 0.0
    %231 = vmatprep.subr.mxu0 0.0
    %232 = vmatpush1.msra.mxu0 0.0
    %233 = vmatprep.subr.mxu0 0.0
    %234 = vmatpush1.msra.mxu0 %v205
    %235 = vmatprep.subr.mxu0 0.0
    %236 = vmatpush1.msra.mxu0 %v204
    %237 = vmatprep.subr.mxu0 0.0
    %238 = vmatpush1.msra.mxu0 %v203
    %239 = vmatprep.subr.mxu0 0.0
    %240 = vmatpush1.msra.mxu0 %v202
    %241 = vmatprep.subr.mxu0 0.0
    %242 = vmatpush2.msra.mxu0 0.0
    %243 = vmatprep.subr.mxu0 0.0
    %244 = vmatpush2.msra.mxu0 0.0
    %245 = vmatprep.subr.mxu0 0.0
    %246 = vmatpush2.msra.mxu0 0.0
    %247 = vmatprep.subr.mxu0 0.0
    %248 = vmatpush2.msra.mxu0 0.0
    %249 = vmatprep.subr.mxu0 0.0
    %250 = vmatpush2.msra.mxu0 0.0
    %251 = vmatprep.subr.mxu0 0.0
    %252 = vmatpush2.msra.mxu0 0.0
    %253 = vmatprep.subr.mxu0 0.0
    %254 = vmatpush2.msra.mxu0 0.0
    %255 = vmatprep.subr.mxu0 0.0
    %256 = vmatpush2.msra.mxu0 0.0
    %257 = vmatprep.subr.mxu0 0.0
    %258 = vmatpush2.msra.mxu0 0.0
    %259 = vmatprep.subr.mxu0 0.0
    %260 = vmatpush2.msra.mxu0 0.0
    %261 = vmatprep.subr.mxu0 0.0
    %262 = vmatpush2.msra.mxu0 0.0
    %263 = vmatprep.subr.mxu0 0.0
    %264 = vmatpush2.msra.mxu0 0.0
    %265 = vmatprep.subr.mxu0 0.0
    %266 = vmatpush2.msra.mxu0 0.0
    %267 = vmatprep.subr.mxu0 0.0
    %268 = vmatpush2.msra.mxu0 0.0
    %269 = vmatprep.subr.mxu0 0.0
    %270 = vmatpush2.msra.mxu0 0.0
    %271 = vmatprep.subr.mxu0 0.0
    %272 = vmatpush2.msra.mxu0 0.0
    %273 = vmatprep.mubr.f32.mxu0 0.0
    %274 = vmatmul.mubr.f32.gmra.mxu0 %v207
    %v275 = vpop.f32.mrf.mxu0
    %v276 = vadd.f32 0.0, %v275
    %v277 = vpop.f32.mrf.mxu0
    %278 = vdwg.mxu0
    %v281 = vunpack.c.l.s4 1966171168
    %v282 = vunpack.c.0.s8 %v281
    %v283 = vlaneseq
    %v284 = vshrl.u32 %v283, 7
    %v285 = vsub.s32 %v282, %v284
    %v286 = vrot.slane %v276, %v285
    %v287 = vcombine.high %v286, %v286
    %v289 = vunpack.c.l.s4 1966171168
    %v290 = vunpack.c.0.s8 %v289
    %v291 = vlaneseq
    %v292 = vshrl.u32 %v291, 7
    %v293 = vsub.s32 %v290, %v292
    %v294 = vrot.slane %v286, %v293
    %v296 = vunpack.c.l.s4 1966171168
    %v297 = vunpack.c.0.s8 %v296
    %v298 = vlaneseq
    %v299 = vshrl.u32 %v298, 7
    %v300 = vsub.s32 %v297, %v299
    %v301 = vrot.slane %v287, %v300
    %v302 = vlaneseq
    %v303 = vshrl.u32 %v302, 7
    %v304 = vsub.s32 0, %v303
    %v305 = vrot.slane %v294, %v304
    %v306 = vlaneseq
    %v307 = vshrl.u32 %v306, 7
    %v308 = vsub.s32 0, %v307
    %v309 = vrot.slane %v301, %v308
    %v312 = vmul.f32 %v193, %v305
    %v313 = vmul.f32 %v198, %v309
    %v314 = vsel %vm119, %v312, 0.0
    %315 = vadd.xlane.f32.xlu0 %v314
    %v316 = vpop.xlane.xlu0 %315
    %v317 = vsel %vm119, %v313, 0.0
    %318 = vadd.xlane.f32.xlu0 %v317
    %v319 = vpop.xlane.xlu0 %318
    %v320 = vmul.f32 %v316, 0.17677669
    %v321 = vmul.f32 %v319, 0.17677669
    %v324 = vlaneseq
    %v325 = vand.u32 %v324, 127
    %v326 = vlaneseq
    %v327 = vshrl.u32 %v326, 7
    %v328 = vsub.s32 %v325, %v327
    %v329 = vrot.slane %v320, %v328
    %v330 = vlaneseq
    %v331 = vshrl.u32 %v330, 7
    %v332 = vsub.s32 %v325, %v331
    %v333 = vrot.slane %v321, %v332
    %vm334 = vcmask 1041409
    %v335 = vsel %vm334, %v333, %v329
    %vm337 = vcmask 58368
    %v338 = vsel %vm337, %v335, -inf
    %339 = vmax.xlane.f32.xlu0 %v338
    %v340 = vpop.xlane.xlu0 %339
    %v342 = vlaneseq
    %v343 = vshrl.u32 %v342, 7
    %v344 = vsub.s32 0, %v343
    %v345 = vrot.slane %v340, %v344
    %v346 = vlaneseq
    %v347 = vshrl.u32 %v346, 7
    %v348 = vsub.s32 1, %v347
    %v349 = vrot.slane %v340, %v348
    %v352 = vsub.f32 %v320, %v345
    %v353 = vsub.f32 %v321, %v349
    %v354 = vmul.f32 %v352, 1.442695
    %v355 = vpow.pop %v354
    %v356 = vmul.f32 %v353, 1.442695
    %v357 = vpow.pop %v356
    %360 = vset.pattern.permute.xlu0 0
    %361 = vperm.xlu0 %360, %v355
    %v362 = vpop.permute.xlu0 %361
    %363 = vset.pattern.permute.xlu0 0
    %364 = vperm.xlu0 %363, %v357
    %v365 = vpop.permute.xlu0 %364
    %v366 = vlaneseq
    %v367 = vshrl.u32 %v366, 7
    %v368 = vsub.s32 %v325, %v367
    %v369 = vrot.slane %v362, %v368
    %v370 = vlaneseq
    %v371 = vshrl.u32 %v370, 7
    %v372 = vsub.s32 %v325, %v371
    %v373 = vrot.slane %v365, %v372
    %v374 = vsel %vm334, %v373, %v369
    %v376 = vsel %vm337, %v374, 0.0
    %377 = vadd.xlane.f32.xlu0 %v376
    %v378 = vpop.xlane.xlu0 %377
    %v379 = vrcp.pop %v378
    %v380 = vmul.f32 %v378, %v379
    %v381 = vsub.f32 2.0, %v380
    %v382 = vmul.f32 %v379, %v381
    %v384 = vlaneseq
    %v385 = vshrl.u32 %v384, 7
    %v386 = vsub.s32 0, %v385
    %v387 = vrot.slane %v382, %v386
    %v388 = vlaneseq
    %v389 = vshrl.u32 %v388, 7
    %v390 = vsub.s32 1, %v389
    %v391 = vrot.slane %v382, %v390
    %v394 = vmul.f32 %v355, %v387
    %v395 = vmul.f32 %v357, %v391
    %v396 = vld [vmem:[#allocation10] sm:$0xff]
    %v397 = vld [vmem:[#allocation10 + $0x8] sm:$0xff]
    %v398 = vld [vmem:[#allocation10 + $0x10] sm:$0xff]
    %v399 = vld [vmem:[#allocation10 + $0x18] sm:$0xff]
    %400 = vmatprep.subr.mxu0 0.0
    %401 = vmatpush1.msra.mxu0 0.0
    %402 = vmatprep.subr.mxu0 0.0
    %403 = vmatpush1.msra.mxu0 0.0
    %404 = vmatprep.subr.mxu0 0.0
    %405 = vmatpush1.msra.mxu0 0.0
    %406 = vmatprep.subr.mxu0 0.0
    %407 = vmatpush1.msra.mxu0 0.0
    %408 = vmatprep.subr.mxu0 0.0
    %409 = vmatpush1.msra.mxu0 0.0
    %410 = vmatprep.subr.mxu0 0.0
    %411 = vmatpush1.msra.mxu0 0.0
    %412 = vmatprep.subr.mxu0 0.0
    %413 = vmatpush1.msra.mxu0 0.0
    %414 = vmatprep.subr.mxu0 0.0
    %415 = vmatpush1.msra.mxu0 0.0
    %416 = vmatprep.subr.mxu0 0.0
    %417 = vmatpush1.msra.mxu0 0.0
    %418 = vmatprep.subr.mxu0 0.0
    %419 = vmatpush1.msra.mxu0 0.0
    %420 = vmatprep.subr.mxu0 0.0
    %421 = vmatpush1.msra.mxu0 0.0
    %422 = vmatprep.subr.mxu0 0.0
    %423 = vmatpush1.msra.mxu0 0.0
    %424 = vmatprep.subr.mxu0 0.0
    %425 = vmatpush1.msra.mxu0 %v399
    %426 = vmatprep.subr.mxu0 0.0
    %427 = vmatpush1.msra.mxu0 %v398
    %428 = vmatprep.subr.mxu0 0.0
    %429 = vmatpush1.msra.mxu0 %v397
    %430 = vmatprep.subr.mxu0 0.0
    %431 = vmatpush1.msra.mxu0 %v396
    %432 = vmatprep.subr.mxu0 0.0
    %433 = vmatpush2.msra.mxu0 0.0
    %434 = vmatprep.subr.mxu0 0.0
    %435 = vmatpush2.msra.mxu0 0.0
    %436 = vmatprep.subr.mxu0 0.0
    %437 = vmatpush2.msra.mxu0 0.0
    %438 = vmatprep.subr.mxu0 0.0
    %439 = vmatpush2.msra.mxu0 0.0
    %440 = vmatprep.subr.mxu0 0.0
    %441 = vmatpush2.msra.mxu0 0.0
    %442 = vmatprep.subr.mxu0 0.0
    %443 = vmatpush2.msra.mxu0 0.0
    %444 = vmatprep.subr.mxu0 0.0
    %445 = vmatpush2.msra.mxu0 0.0
    %446 = vmatprep.subr.mxu0 0.0
    %447 = vmatpush2.msra.mxu0 0.0
    %448 = vmatprep.subr.mxu0 0.0
    %449 = vmatpush2.msra.mxu0 0.0
    %450 = vmatprep.subr.mxu0 0.0
    %451 = vmatpush2.msra.mxu0 0.0
    %452 = vmatprep.subr.mxu0 0.0
    %453 = vmatpush2.msra.mxu0 0.0
    %454 = vmatprep.subr.mxu0 0.0
    %455 = vmatpush2.msra.mxu0 0.0
    %456 = vmatprep.subr.mxu0 0.0
    %457 = vmatpush2.msra.mxu0 0.0
    %458 = vmatprep.subr.mxu0 0.0
    %459 = vmatpush2.msra.mxu0 0.0
    %460 = vmatprep.subr.mxu0 0.0
    %461 = vmatpush2.msra.mxu0 0.0
    %462 = vmatprep.subr.mxu0 0.0
    %463 = vmatpush2.msra.mxu0 0.0
    %464 = vmatprep.mubr.f32.mxu0 0.0
    %465 = vmatmul.mubr.f32.gmra.mxu0 %v121
    %v466 = vpop.f32.mrf.mxu0
    %v467 = vadd.f32 0.0, %v466
    %v468 = vpop.f32.mrf.mxu0
    %469 = vmatprep.mubr.f32.mxu0 0.0
    %470 = vmatmul.mubr.f32.gmra.mxu0 %v124
    %v471 = vpop.f32.mrf.mxu0
    %v472 = vadd.f32 0.0, %v471
    %v473 = vpop.f32.mrf.mxu0
    %474 = vdwg.mxu0
    %476 = vset.pattern.permute.xlu0 0
    %477 = vperm.xlu0 %476, %v394
    %v478 = vpop.permute.xlu0 %477
    %481 = vset.pattern.permute.xlu0 0
    %482 = vperm.xlu0 %481, %v395
    %v483 = vpop.permute.xlu0 %482
    %v485 = vmul.f32 %v478, %v467
    %v486 = vmul.f32 %v483, %v472
    %v487 = vsel %vm119, %v485, 0.0
    %v488 = vrot.slane %v487, 4
    %v489 = vadd.f32 %v487, %v488
    %v490 = vrot.slane %v489, 2
    %v491 = vadd.f32 %v489, %v490
    %v492 = vrot.slane %v491, 1
    %v493 = vadd.f32 %v491, %v492
    %v494 = vsel %vm119, %v486, 0.0
    %v495 = vrot.slane %v494, 4
    %v496 = vadd.f32 %v494, %v495
    %v497 = vrot.slane %v496, 2
    %v498 = vadd.f32 %v496, %v497
    %v499 = vrot.slane %v498, 1
    %v500 = vadd.f32 %v498, %v499
    %v501 = vld [vmem:[#allocation11] sm:$0xff]
    %v502 = vld [vmem:[#allocation11 + $0x8] sm:$0xff]
    %v503 = vld [vmem:[#allocation11 + $0x10] sm:$0xff]
    %v504 = vld [vmem:[#allocation11 + $0x18] sm:$0xff]
    %v507 = vsel %vm334, %v500, %v493
    %v508 = vsel %vm119, %v507, 0
    %510 = vmatprep.subr.mxu0 0.0
    %511 = vmatpush1.msra.mxu0 0.0
    %512 = vmatprep.subr.mxu0 0.0
    %513 = vmatpush1.msra.mxu0 0.0
    %514 = vmatprep.subr.mxu0 0.0
    %515 = vmatpush1.msra.mxu0 0.0
    %516 = vmatprep.subr.mxu0 0.0
    %517 = vmatpush1.msra.mxu0 0.0
    %518 = vmatprep.subr.mxu0 0.0
    %519 = vmatpush1.msra.mxu0 0.0
    %520 = vmatprep.subr.mxu0 0.0
    %521 = vmatpush1.msra.mxu0 0.0
    %522 = vmatprep.subr.mxu0 0.0
    %523 = vmatpush1.msra.mxu0 0.0
    %524 = vmatprep.subr.mxu0 0.0
    %525 = vmatpush1.msra.mxu0 0.0
    %526 = vmatprep.subr.mxu0 0.0
    %527 = vmatpush1.msra.mxu0 0.0
    %528 = vmatprep.subr.mxu0 0.0
    %529 = vmatpush1.msra.mxu0 0.0
    %530 = vmatprep.subr.mxu0 0.0
    %531 = vmatpush1.msra.mxu0 0.0
    %532 = vmatprep.subr.mxu0 0.0
    %533 = vmatpush1.msra.mxu0 0.0
    %534 = vmatprep.subr.mxu0 0.0
    %535 = vmatpush1.msra.mxu0 %v504
    %536 = vmatprep.subr.mxu0 0.0
    %537 = vmatpush1.msra.mxu0 %v503
    %538 = vmatprep.subr.mxu0 0.0
    %539 = vmatpush1.msra.mxu0 %v502
    %540 = vmatprep.subr.mxu0 0.0
    %541 = vmatpush1.msra.mxu0 %v501
    %542 = vmatprep.subr.mxu0 0.0
    %543 = vmatpush2.msra.mxu0 0.0
    %544 = vmatprep.subr.mxu0 0.0
    %545 = vmatpush2.msra.mxu0 0.0
    %546 = vmatprep.subr.mxu0 0.0
    %547 = vmatpush2.msra.mxu0 0.0
    %548 = vmatprep.subr.mxu0 0.0
    %549 = vmatpush2.msra.mxu0 0.0
    %550 = vmatprep.subr.mxu0 0.0
    %551 = vmatpush2.msra.mxu0 0.0
    %552 = vmatprep.subr.mxu0 0.0
    %553 = vmatpush2.msra.mxu0 0.0
    %554 = vmatprep.subr.mxu0 0.0
    %555 = vmatpush2.msra.mxu0 0.0
    %556 = vmatprep.subr.mxu0 0.0
    %557 = vmatpush2.msra.mxu0 0.0
    %558 = vmatprep.subr.mxu0 0.0
    %559 = vmatpush2.msra.mxu0 0.0
    %560 = vmatprep.subr.mxu0 0.0
    %561 = vmatpush2.msra.mxu0 0.0
    %562 = vmatprep.subr.mxu0 0.0
    %563 = vmatpush2.msra.mxu0 0.0
    %564 = vmatprep.subr.mxu0 0.0
    %565 = vmatpush2.msra.mxu0 0.0
    %566 = vmatprep.subr.mxu0 0.0
    %567 = vmatpush2.msra.mxu0 0.0
    %568 = vmatprep.subr.mxu0 0.0
    %569 = vmatpush2.msra.mxu0 0.0
    %570 = vmatprep.subr.mxu0 0.0
    %571 = vmatpush2.msra.mxu0 0.0
    %572 = vmatprep.subr.mxu0 0.0
    %573 = vmatpush2.msra.mxu0 0.0
    %574 = vmatprep.mubr.f32.mxu0 0.0
    %575 = vmatmul.mubr.f32.gmra.mxu0 %v508
    %v576 = vpop.f32.mrf.mxu0
    %v577 = vadd.f32 0.0, %v576
    %v578 = vpop.f32.mrf.mxu0
    %579 = vdwg.mxu0
    %v580 = vtanh.pop %v577
    %vm581 = vcmask 254976
    %v582 = vsel %vm581, %v580, 0.0
    %583 = vadd.xlane.f32.xlu0 %v582
    %v584 = vpop.xlane.xlu0 %583
    %v585 = vrcp.pop 32.0
    %v586 = vmul.f32 %v584, %v585
    %v587 = vsub.f32 %v580, %v586
    %v588 = vmul.f32 %v587, %v587
    %v589 = vsel %vm581, %v588, 0.0
    %590 = vadd.xlane.f32.xlu0 %v589
    %v591 = vpop.xlane.xlu0 %590
    %v592 = vmul.f32 %v591, %v585
    %v593 = vadd.f32 %v592, 1e-05
    %v594 = vrsqrt.pop %v593
    %v595 = vmul.f32 %v587, %v594
    %v596 = vld [vmem:[%s6] sm:$0x1]
    %v598 = vlaneseq
    %v599 = vshrl.u32 %v598, 7
    %v600 = vsub.s32 0, %v599
    %v601 = vrot.slane %v596, %v600
    %v603 = vmul.f32 %v595, %v601
    %v604 = vld [vmem:[%s7] sm:$0x1]
    %v606 = vlaneseq
    %v607 = vshrl.u32 %v606, 7
    %v608 = vsub.s32 0, %v607
    %v609 = vrot.slane %v604, %v608
    %v611 = vadd.f32 %v603, %v609
    %612 = vst.msk [vmem:[#allocation13] sm:$0x3] %vm581, %v611
    %v613 = vlaneseq
    %v614 = vshrl.u32 %v613, 7
    %v615 = vsub.s32 %v325, %v614
    %v616 = vrot.slane %v478, %v615
    %v617 = vlaneseq
    %v618 = vshrl.u32 %v617, 7
    %v619 = vsub.s32 %v325, %v618
    %v620 = vrot.slane %v483, %v619
    %v621 = vsel %vm334, %v620, %v616
    %623 = vst.msk [vmem:[#allocation14] sm:$0x3] %vm337, %v621
    // Predicated region
    $region58: #{tpu_custom_call.1} parent=1 // pred_check
      _
    $region59: #{tpu_custom_call.1} parent=1 // pred_check_branch
      %625 = sbr.rel (0) target = $region61
    $region60: #{tpu_custom_call.1} parent=1 // pred_region
      %s627 = ssub.s32 32, 32
      %628 = vsyncadd [#allocation4], %s627
      %s630 = sshll.u32 [#allocation13], 4
      %s631 = int_to_ptr.vmem [resolvable:$true] %s630
      %633 = dma.vmem_to_hbm [thread:$0]  %s631, 32, %s8, [#allocation4]
    $region61: #{tpu_custom_call.1} parent=1 // pred_fallthru
      _
    // Predicated region
    $region62: #{tpu_custom_call.1} parent=1 // pred_check
      _
    $region63: #{tpu_custom_call.1} parent=1 // pred_check_branch
      %635 = sbr.rel (0) target = $region65
    $region64: #{tpu_custom_call.1} parent=1 // pred_region
      %s637 = ssub.s32 32, 32
      %638 = vsyncadd [#allocation15], %s637
      %s640 = sshll.u32 [#allocation14], 4
      %s641 = int_to_ptr.vmem [resolvable:$true] %s640
      %643 = dma.vmem_to_hbm [thread:$0]  %s641, 32, %s9, [#allocation15]
    $region65: #{tpu_custom_call.1} parent=1 // pred_fallthru
      _
    // Predicated region
    $region66: #{tpu_custom_call.1} parent=1 // pred_check
      _
    $region67: #{tpu_custom_call.1} parent=1 // pred_check_branch
      %645 = sbr.rel (0) target = $region69
    $region68: #{tpu_custom_call.1} parent=1 // pred_region
      %646 = dma.done [#allocation4], 32
    $region69: #{tpu_custom_call.1} parent=1 // pred_fallthru
      _
    // Predicated region
    $region70: #{tpu_custom_call.1} parent=1 // pred_check
      _
    $region71: #{tpu_custom_call.1} parent=1 // pred_check_branch
      %648 = sbr.rel (0) target = $region73
    $region72: #{tpu_custom_call.1} parent=1 // pred_region
      %649 = dma.done [#allocation15], 32
    $region73: #{tpu_custom_call.1} parent=1 // pred_fallthru
      _
    %650 = vsyncpa [#allocation3], 1
    %651 = vsyncpa [#allocation6], 1
    %652 = vsyncpa [#allocation9], 1
    %653 = vsyncpa [#allocation12], 1
    %654 = vsyncpa [#allocation4], 1
    %655 = vsyncpa [#allocation15], 1

</llo_original>
